<compile_context>
chip_gen: v7x
topology: tpu7x:2x2x1
jax: 0.10.0
libtpu: 0.0.40
codegen_flags: <defaults>
</compile_context>

<pallas_src>
import functools

import jax
import jax.numpy as jnp
from jax.experimental import pallas as pl
from jax.experimental.pallas import tpu as pltpu


def _round_up(x, m):
    return ((x + m - 1) // m) * m


def _patch_embed_kernel(p_ref, w_ref, pos_ref, out_ref):
    """One grid step == one row tile of flattened patches.

    p_ref:   (rt, K)  bf16 flattened patches for this row tile
    w_ref:   (K, Dp)  bf16 conv weight as a matmul weight (VMEM-resident)
    pos_ref: (rt, Dp) f32  per-row additive term (pos_emb[1:] + conv bias)
    out_ref: (rt, Dp) patch-token embeddings for this row tile
    """
    acc = jnp.dot(p_ref[...], w_ref[...], preferred_element_type=jnp.float32)
    out_ref[...] = (acc + pos_ref[...]).astype(out_ref.dtype)


def embeddings_forward(x, conv_w, conv_b, cls_token, pos_emb, patch_size,
                       row_tile=256):
    """x: (B, C, H, W) NCHW.  conv_w: (D, C, ph, pw) (PyTorch layout).
    conv_b: (D,). cls_token: (1, 1, D). pos_emb: (1, N+1, D).
    Returns (B, N+1, D) — identical semantics to the PyTorch module (eval)."""
    B, C, H, W = x.shape
    D = conv_w.shape[0]
    ph, pw = patch_size
    nh, nw = H // ph, W // pw
    N = nh * nw
    K = C * ph * pw
    out_dtype = x.dtype

    # --- wrapper glue: extract non-overlapping patches, flatten each patch in
    # (C, ph, pw) order to match Conv2d's weight flattening.  (Mimic conv's
    # truncation of any trailing remainder.)
    x_t = x[:, :, :nh * ph, :nw * pw]
    patches = x_t.reshape(B, C, nh, ph, nw, pw)
    patches = patches.transpose(0, 2, 4, 1, 3, 5).reshape(B * N, K)

    # bf16 MXU operands; accumulation stays f32 inside the kernel.
    patches = patches.astype(jnp.bfloat16)
    w_mat = conv_w.reshape(D, K).T.astype(jnp.bfloat16)           # (K, D)

    # Fold the conv bias into the position embeddings for patch tokens once.
    pos = pos_emb.reshape(N + 1, D).astype(jnp.float32)           # (N+1, D)
    pos_patch = pos[1:] + conv_b.astype(jnp.float32)[None, :]     # (N, D)
    # Per-flat-row additive term (row r -> batch r//N, token r%N).
    pos_rows = jnp.tile(pos_patch, (B, 1))                        # (B*N, D)

    # Lane/sublane-dense tiling: rows -> multiple of the row tile (>=8),
    # hidden dim -> multiple of 128 (matters for small-D configs; production
    # ViT D=768/1024/1280 is already a multiple of 128).
    R = B * N
    rt = min(int(row_tile), _round_up(R, 8))
    rt = _round_up(rt, 8)
    Rp = _round_up(R, rt)
    Dp = _round_up(D, 128)

    patches_p = jnp.pad(patches, ((0, Rp - R), (0, 0)))
    w_p = jnp.pad(w_mat, ((0, 0), (0, Dp - D)))
    pos_p = jnp.pad(pos_rows, ((0, Rp - R), (0, Dp - D)))

    grid = (Rp // rt,)

    patch_tokens = pl.pallas_call(
        _patch_embed_kernel,
        out_shape=jax.ShapeDtypeStruct((Rp, Dp), out_dtype),
        grid_spec=pltpu.PrefetchScalarGridSpec(
            num_scalar_prefetch=0,
            grid=grid,
            in_specs=[
                pl.BlockSpec((rt, K), lambda r: (r, 0)),     # patches row tile
                pl.BlockSpec((K, Dp), lambda r: (0, 0)),     # weight, resident
                pl.BlockSpec((rt, Dp), lambda r: (r, 0)),    # pos+bias row tile
            ],
            out_specs=pl.BlockSpec((rt, Dp), lambda r: (r, 0)),
        ),
        compiler_params=pltpu.CompilerParams(
            dimension_semantics=("parallel",)),
    )(patches_p, w_p, pos_p)

    # --- wrapper reassembly: slice padding away, add the cls row, build the
    # (B, N+1, D) token tensor.  Keeps the kernel's stores fully aligned.
    patch_tokens = patch_tokens[:R, :D].reshape(B, N, D)
    cls_row = (cls_token.reshape(1, D).astype(jnp.float32)
               + pos[0:1]).astype(out_dtype)                      # (1, D)
    cls_rows = jnp.broadcast_to(cls_row[None, :, :], (B, 1, D))
    return jnp.concatenate([cls_rows, patch_tokens], axis=1)      # (B, N+1, D)


def _reference_forward(x, conv_w, conv_b, cls_token, pos_emb, patch_size):
    """Pure-JAX (f32) reference reproducing the PyTorch forward exactly."""
    B = x.shape[0]
    y = jax.lax.conv_general_dilated(
        x, conv_w, window_strides=patch_size, padding="VALID",
        dimension_numbers=("NCHW", "OIHW", "NCHW"))
    y = y + conv_b.reshape(1, -1, 1, 1)
    y = y.reshape(B, y.shape[1], -1)          # flatten(2)
    y = y.transpose(0, 2, 1)                  # transpose(-1, -2)
    cls = jnp.broadcast_to(cls_token, (B, 1, cls_token.shape[-1]))
    y = jnp.concatenate([cls, y], axis=1)
    return y + pos_emb                        # dropout (eval) = identity


if __name__ == "__main__":
    # Small config: img 32x32, patch 8x8 -> n_patches = 16 per image, hidden 32.
    B, C, H, W = 2, 3, 32, 32
    patch_size = (8, 8)
    D = 32
    N = (H // patch_size[0]) * (W // patch_size[1])

    key = jax.random.PRNGKey(0)
    kx, kw, kb, kc, kp = jax.random.split(key, 5)
    x = jax.random.normal(kx, (B, C, H, W), dtype=jnp.float32)
    conv_w = jax.random.normal(kw, (D, C, patch_size[0], patch_size[1]),
                               dtype=jnp.float32) * 0.05
    conv_b = jax.random.normal(kb, (D,), dtype=jnp.float32) * 0.05
    # (PyTorch inits these to zeros; use small random values so the adds are
    # actually exercised — still deterministic.)
    cls_token = jax.random.normal(kc, (1, 1, D), dtype=jnp.float32) * 0.02
    pos_emb = jax.random.normal(kp, (1, N + 1, D), dtype=jnp.float32) * 0.02

    # row_tile=8 so the small test exercises multiple parallel grid steps
    # (B*N = 32 rows -> grid=(4,)).  Production calls use the default 256.
    fwd = jax.jit(functools.partial(embeddings_forward,
                                    patch_size=patch_size, row_tile=8))
    out = fwd(x, conv_w, conv_b, cls_token, pos_emb)
    jax.block_until_ready(out)

    ref = _reference_forward(x, conv_w, conv_b, cls_token, pos_emb, patch_size)
    assert out.shape == (B, N + 1, D), out.shape
    # Tolerance loosened vs the pure-f32 reference because the kernel feeds
    # the MXU bf16 operands (f32 accumulation), per the perf review.
    max_err = float(jnp.max(jnp.abs(out - ref)))
    assert jnp.allclose(out, ref, atol=3e-2, rtol=3e-2), max_err
    print("KERNEL_OK")
</pallas_src>

<mosaic_0001>
module attributes {stable_mosaic.version = 11 : i64} {
  func.func @_patch_embed_kernel(%arg0: i32, %arg1: memref<8x192xbf16, #tpu.memory_space<vmem>>, %arg2: memref<192x128xbf16, #tpu.memory_space<vmem>>, %arg3: memref<8x128xf32, #tpu.memory_space<vmem>>, %arg4: memref<8x128xf32, #tpu.memory_space<vmem>>) attributes {dimension_semantics = [#tpu.dimension_semantics<parallel>], iteration_bounds = array<i64: 4>, scalar_prefetch = 0 : i64, scratch_operands = 0 : i64, tpu.core_type = #tpu.core_type<tc>, window_params = [{transform_indices = @transform_0, window_bounds = array<i64: 8, 192>}, {pipeline_mode = #tpu.pipeline_mode<synchronous>, transform_indices = @transform_1, window_bounds = array<i64: 192, 128>}, {transform_indices = @transform_2, window_bounds = array<i64: 8, 128>}, {transform_indices = @transform_3, window_bounds = array<i64: 8, 128>}]} {
    %c0 = arith.constant 0 : index
    %c0_0 = arith.constant 0 : index
    %0 = vector.load %arg1[%c0, %c0_0] : memref<8x192xbf16, #tpu.memory_space<vmem>>, vector<8x192xbf16>
    %c0_1 = arith.constant 0 : index
    %c0_2 = arith.constant 0 : index
    %1 = vector.load %arg2[%c0_1, %c0_2] : memref<192x128xbf16, #tpu.memory_space<vmem>>, vector<192x128xbf16>
    %cst = arith.constant dense<0.000000e+00> : vector<8x128xf32>
    %2 = tpu.matmul %0, %1, %cst {dimension_numbers = #tpu.dot_dimension_numbers<[1], [0], [0], [1], [0, 0, 1, 1], [], []>} : vector<8x192xbf16>, vector<192x128xbf16>, vector<8x128xf32> -> vector<8x128xf32>
    %c0_3 = arith.constant 0 : index
    %c0_4 = arith.constant 0 : index
    %3 = vector.load %arg3[%c0_3, %c0_4] : memref<8x128xf32, #tpu.memory_space<vmem>>, vector<8x128xf32>
    %4 = arith.addf %2, %3 : vector<8x128xf32>
    %c0_5 = arith.constant 0 : index
    %c0_6 = arith.constant 0 : index
    %5 = vector.load %arg4[%c0_5, %c0_6] : memref<8x128xf32, #tpu.memory_space<vmem>>, vector<8x128xf32>
    tpu.vector_store %arg4[%c0_5, %c0_6], %4 {strides = array<i32>} : memref<8x128xf32, #tpu.memory_space<vmem>>, vector<8x128xf32>,
    return
  }
  func.func @transform_0(%arg0: i32) -> (i32, i32) {
    %c0_i32 = arith.constant 0 : i32
    %c0_i32_0 = arith.constant 0 : i32
    return %arg0, %c0_i32 : i32, i32
  }
  func.func @transform_1(%arg0: i32) -> (i32, i32) {
    %c0_i32 = arith.constant 0 : i32
    %c0_i32_0 = arith.constant 0 : i32
    %c0_i32_1 = arith.constant 0 : i32
    return %c0_i32, %c0_i32_0 : i32, i32
  }
  func.func @transform_2(%arg0: i32) -> (i32, i32) {
    %c0_i32 = arith.constant 0 : i32
    %c0_i32_0 = arith.constant 0 : i32
    return %arg0, %c0_i32 : i32, i32
  }
  func.func @transform_3(%arg0: i32) -> (i32, i32) {
    %c0_i32 = arith.constant 0 : i32
    %c0_i32_0 = arith.constant 0 : i32
    return %arg0, %c0_i32 : i32, i32
  }
}

</mosaic_0001>

<llo_original>
// kernel: embeddings_forward.1
$region0: #{embeddings_forward.1}
  #allocation0 [shape = 'u32[]', space=smem, size = 0x4, offset = 0x4, fixed_abs, tag = 'smem constant byte address 0x4 - core index']
  #allocation1 [shape = 'u32[144,128]{1,0:T(1,128)}', space=vmem, size = 0x12000, scoped, tag = 'internal scratch']
  %s0 = inlined_call_operand.vmem [shape: bf16[32,192], index: 0, kind: input, shape index: {}]
  %s1 = inlined_call_operand.vmem [shape: bf16[192,128], index: 1, kind: input, shape index: {}]
  %s2 = inlined_call_operand.vmem [shape: f32[32,128], index: 2, kind: input, shape index: {}]
  %s3 = inlined_call_operand.vmem [shape: f32[32,128], index: 3, kind: output, shape index: {}]
  %s4 = sld [smem:[#allocation0]]
  $region45: #{embeddings_forward.1} parent=0
    _
  %s6 = ssub.s32 1, %s4
  %s7 = scalar_select 0, %s6, %s4
  loop: start=0, step=1, limit=6
  $region2: #{embeddings_forward.1} parent=0 // loop_pre_header
    _
  $region3: #{embeddings_forward.1} parent=0 // loop_header
    %s9 = sphi 0, %s13
    %p10 = scmp.ge.s32.totalorder %s9, 6
    %s19 = sphi 0, %s21
    %s22 = sphi 0, %s19
    %s23 = sphi 0, %s22
    %s39 = sphi 0, %s23
    %s43 = sphi 0, %s43
    %s45 = sphi 0, %s43
    %s46 = sphi 0, %s45
    %s60 = sphi 0, %s46
    %s66 = sphi 0, %s68
    %s69 = sphi 0, %s66
    %s70 = sphi 0, %s69
    %s86 = sphi 0, %s70
    %s92 = sphi 0, %s94
    %s95 = sphi 0, %s92
    %s96 = sphi 0, %s95
    %s112 = sphi 0, %s96
  $region4: #{embeddings_forward.1} parent=0 // loop_header_branch
    %12 = sbr.rel (%p10) target = $region8
  $region5: #{embeddings_forward.1} parent=0 // loop_body
    %s14 = ssub.s32 %s9, 1
    %s15 = ssub.s32 %s9, 2
    %s16 = sadd.s32 %s9, 1
    %s17 = ssub.s32 %s9, %s16
    %p18 = scmp.eq.s32.totalorder %s17, 0
    %s20 = sadd.s32 %s19, 1
    %s21 = scalar_select %p18, %s19, %s20
    %p24 = pneg %p18
    %p25 = scmp.eq.s32.totalorder %s9, 3
    %p26 = por %p24, %p25
    %p27 = scmp.ne.s32.totalorder %s19, %s22
    %p28 = scmp.eq.s32.totalorder %s9, 0
    %p29 = por %p27, %p28
    %p30 = scmp.ne.s32.totalorder %s19, %s22
    %p31 = scmp.eq.s32.totalorder %s14, 3
    %p32 = por %p30, %p31
    %p33 = scmp.ne.s32.totalorder %s22, %s23
    %p34 = scmp.eq.s32.totalorder %s14, 0
    %p35 = por %p33, %p34
    %p36 = scmp.ne.s32.totalorder %s22, %s23
    %p37 = scmp.eq.s32.totalorder %s15, 3
    %p38 = por %p36, %p37
    %p40 = scmp.ne.s32.totalorder %s23, %s39
    %p41 = scmp.eq.s32.totalorder %s15, 0
    %p42 = por %p40, %p41
    %s44 = sadd.s32 %s43, 1
    %p47 = scmp.eq.s32.totalorder %s9, 3
    %p48 = scmp.ne.s32.totalorder %s43, %s45
    %p49 = scmp.eq.s32.totalorder %s9, 0
    %p50 = por %p48, %p49
    %p51 = scmp.ne.s32.totalorder %s43, %s45
    %p52 = scmp.eq.s32.totalorder %s14, 3
    %p53 = por %p51, %p52
    %p54 = scmp.ne.s32.totalorder %s45, %s46
    %p55 = scmp.eq.s32.totalorder %s14, 0
    %p56 = por %p54, %p55
    %p57 = scmp.ne.s32.totalorder %s45, %s46
    %p58 = scmp.eq.s32.totalorder %s15, 3
    %p59 = por %p57, %p58
    %p61 = scmp.ne.s32.totalorder %s46, %s60
    %p62 = scmp.eq.s32.totalorder %s15, 0
    %p63 = por %p61, %p62
    %s64 = ssub.s32 %s9, %s16
    %p65 = scmp.eq.s32.totalorder %s64, 0
    %s67 = sadd.s32 %s66, 1
    %s68 = scalar_select %p65, %s66, %s67
    %p71 = pneg %p65
    %p72 = scmp.eq.s32.totalorder %s9, 3
    %p73 = por %p71, %p72
    %p74 = scmp.ne.s32.totalorder %s66, %s69
    %p75 = scmp.eq.s32.totalorder %s9, 0
    %p76 = por %p74, %p75
    %p77 = scmp.ne.s32.totalorder %s66, %s69
    %p78 = scmp.eq.s32.totalorder %s14, 3
    %p79 = por %p77, %p78
    %p80 = scmp.ne.s32.totalorder %s69, %s70
    %p81 = scmp.eq.s32.totalorder %s14, 0
    %p82 = por %p80, %p81
    %p83 = scmp.ne.s32.totalorder %s69, %s70
    %p84 = scmp.eq.s32.totalorder %s15, 3
    %p85 = por %p83, %p84
    %p87 = scmp.ne.s32.totalorder %s70, %s86
    %p88 = scmp.eq.s32.totalorder %s15, 0
    %p89 = por %p87, %p88
    %s90 = ssub.s32 %s9, %s16
    %p91 = scmp.eq.s32.totalorder %s90, 0
    %s93 = sadd.s32 %s92, 1
    %s94 = scalar_select %p91, %s92, %s93
    %p97 = pneg %p91
    %p98 = scmp.eq.s32.totalorder %s9, 3
    %p99 = por %p97, %p98
    %p100 = scmp.ne.s32.totalorder %s92, %s95
    %p101 = scmp.eq.s32.totalorder %s9, 0
    %p102 = por %p100, %p101
    %p103 = scmp.ne.s32.totalorder %s92, %s95
    %p104 = scmp.eq.s32.totalorder %s14, 3
    %p105 = por %p103, %p104
    %p106 = scmp.ne.s32.totalorder %s95, %s96
    %p107 = scmp.eq.s32.totalorder %s14, 0
    %p108 = por %p106, %p107
    %p109 = scmp.ne.s32.totalorder %s95, %s96
    %p110 = scmp.eq.s32.totalorder %s15, 3
    %p111 = por %p109, %p110
    %p113 = scmp.ne.s32.totalorder %s96, %s112
    %p114 = scmp.eq.s32.totalorder %s15, 0
    %p115 = por %p113, %p114
    %p116 = scmp.le.s32.totalorder 1, %s9
    %p117 = scmp.lt.s32.totalorder %s9, 5
    %p118 = pnand %p116, %p117
    %p119 = pneg %p118
    // Predicated region
    $region9: #{embeddings_forward.1} parent=5 // pred_check
      _
    $region10: #{embeddings_forward.1} parent=5 // pred_check_branch
      %121 = sbr.rel (%p118) target = $region12
    $region11: #{embeddings_forward.1} parent=5 // pred_region
      %s122 = ssub.s32 %s9, 1
      // Predicated region
      $region13: #{embeddings_forward.1} parent=11 // pred_check
        %p123 = pneg %p56
      $region14: #{embeddings_forward.1} parent=11 // pred_check_branch
        %125 = sbr.rel (%p123) target = $region16
      $region15: #{embeddings_forward.1} parent=11 // pred_region
        _
      $region16: #{embeddings_forward.1} parent=11 // pred_fallthru
        _
    $region12: #{embeddings_forward.1} parent=5 // pred_fallthru
      _
    %p126 = scmp.lt.s32.totalorder %s9, 4
    // Predicated region
    $region17: #{embeddings_forward.1} parent=5 // pred_check
      %p127 = pneg %p126
    $region18: #{embeddings_forward.1} parent=5 // pred_check_branch
      %129 = sbr.rel (%p127) target = $region20
    $region19: #{embeddings_forward.1} parent=5 // pred_region
      // Predicated region
      $region21: #{embeddings_forward.1} parent=19 // pred_check
        %p130 = pneg %p29
      $region22: #{embeddings_forward.1} parent=19 // pred_check_branch
        %132 = sbr.rel (%p130) target = $region24
      $region23: #{embeddings_forward.1} parent=19 // pred_region
        %p133 = scmp.lt.s32.totalorder %s9, 3
        %s134 = scalar_select %p133, %s9, 3
        %s135 = smul.addr %s134, 2
        %s136 = smul.addr %s135, 4
        %s137 = scalar_lea.vmem %s0, %s136
      $region24: #{embeddings_forward.1} parent=19 // pred_fallthru
        _
      // Predicated region
      $region25: #{embeddings_forward.1} parent=19 // pred_check
        %p138 = pneg %p76
      $region26: #{embeddings_forward.1} parent=19 // pred_check_branch
        %140 = sbr.rel (%p138) target = $region28
      $region27: #{embeddings_forward.1} parent=19 // pred_region
        %p141 = scmp.lt.s32.totalorder %s9, 3
        %s142 = scalar_select %p141, %s9, 3
        %s143 = smul.addr %s142, 8
        %s144 = scalar_lea.vmem %s2, %s143
      $region28: #{embeddings_forward.1} parent=19 // pred_fallthru
        _
    $region20: #{embeddings_forward.1} parent=5 // pred_fallthru
      _
    %p145 = scmp.le.s32.totalorder 1, %s9
    %p146 = scmp.lt.s32.totalorder %s9, 5
    %p147 = pnand %p145, %p146
    %p148 = pneg %p147
    // Predicated region
    $region29: #{embeddings_forward.1} parent=5 // pred_check
      _
    $region30: #{embeddings_forward.1} parent=5 // pred_check_branch
      %150 = sbr.rel (%p147) target = $region32
    $region31: #{embeddings_forward.1} parent=5 // pred_region
      %s151 = ssub.s32 %s9, 1
      %p152 = scmp.lt.s32.totalorder %s14, 3
      %s153 = scalar_select %p152, %s14, 3
      %s154 = smul.addr %s153, 2
      %s155 = smul.addr %s154, 4
      %s156 = scalar_lea.vmem %s0, %s155
      %p157 = pneg %p35
      %p158 = pneg %p32
      %p159 = pneg %p56
      %p160 = pneg %p53
      %p161 = scmp.lt.s32.totalorder %s14, 3
      %s162 = scalar_select %p161, %s14, 3
      %s163 = smul.addr %s162, 8
      %s164 = scalar_lea.vmem %s2, %s163
      %p165 = pneg %p82
      %p166 = pneg %p79
      %p167 = pneg %p108
      %p168 = pneg %p105
      %p169 = scmp.lt.s32.totalorder %s14, 3
      %s170 = scalar_select %p169, %s14, 3
      %s171 = smul.addr %s170, 8
      %s172 = scalar_lea.vmem %s3, %s171
      %p173 = scmp.lt.s32.totalorder %s14, 3
      %s174 = scalar_select %p173, %s14, 3
      %s175 = smul.addr %s174, 2
      %s176 = smul.addr %s175, 4
      %s177 = scalar_lea.vmem %s0, %s176
      %p178 = scmp.lt.s32.totalorder %s14, 3
      %s179 = scalar_select %p178, %s14, 3
      %s180 = smul.addr %s179, 8
      %s181 = scalar_lea.vmem %s2, %s180
      %p182 = scmp.lt.s32.totalorder %s14, 3
      %s183 = scalar_select %p182, %s14, 3
      %s184 = smul.addr %s183, 8
      %s185 = scalar_lea.vmem %s3, %s184
      %v187 = vld [vmem:[%s177] sm:$0xff]
      %v188 = vld [vmem:[%s1] sm:$0xf]
      %v189 = vld [vmem:[%s1 + $0x4] sm:$0xf]
      %v190 = vld [vmem:[%s1 + $0x8] sm:$0xf]
      %v191 = vld [vmem:[%s1 + $0xc] sm:$0xf]
      %v192 = vld [vmem:[%s1 + $0x10] sm:$0xf]
      %v193 = vld [vmem:[%s1 + $0x14] sm:$0xf]
      %v194 = vld [vmem:[%s1 + $0x18] sm:$0xf]
      %v195 = vld [vmem:[%s1 + $0x1c] sm:$0xf]
      %v196 = vld [vmem:[%s1 + $0x20] sm:$0xf]
      %v197 = vld [vmem:[%s1 + $0x24] sm:$0xf]
      %v198 = vld [vmem:[%s1 + $0x28] sm:$0xf]
      %v199 = vld [vmem:[%s1 + $0x2c] sm:$0xf]
      %v200 = vld [vmem:[%s1 + $0x30] sm:$0xf]
      %v201 = vld [vmem:[%s1 + $0x34] sm:$0xf]
      %v202 = vld [vmem:[%s1 + $0x38] sm:$0xf]
      %v203 = vld [vmem:[%s1 + $0x3c] sm:$0xf]
      %v204 = vld [vmem:[%s1 + $0x40] sm:$0xf]
      %v205 = vld [vmem:[%s1 + $0x44] sm:$0xf]
      %v206 = vld [vmem:[%s1 + $0x48] sm:$0xf]
      %v207 = vld [vmem:[%s1 + $0x4c] sm:$0xf]
      %v208 = vld [vmem:[%s1 + $0x50] sm:$0xf]
      %v209 = vld [vmem:[%s1 + $0x54] sm:$0xf]
      %v210 = vld [vmem:[%s1 + $0x58] sm:$0xf]
      %v211 = vld [vmem:[%s1 + $0x5c] sm:$0xf]
      %v212 = vld [vmem:[%s181] sm:$0xff]
      %v214 = vunpack.c.l.b16 %v187
      %v215 = vunpack.c.h.b16 %v187
      %v216 = vpack.c.b16 %v214, %v214
      %v217 = vpack.c.b16 %v215, %v215
      %v243 = vunpack.c.l.b16 %v188
      %v244 = vunpack.c.l.b16 %v189
      %v245 = vunpack.c.l.b16 %v190
      %v246 = vunpack.c.l.b16 %v191
      %v247 = vunpack.c.l.b16 %v192
      %v248 = vunpack.c.l.b16 %v193
      %v249 = vunpack.c.l.b16 %v194
      %v250 = vunpack.c.l.b16 %v195
      %v251 = vunpack.c.l.b16 %v196
      %v252 = vunpack.c.l.b16 %v197
      %v253 = vunpack.c.l.b16 %v198
      %v254 = vunpack.c.l.b16 %v199
      %v255 = vunpack.c.l.b16 %v200
      %v256 = vunpack.c.l.b16 %v201
      %v257 = vunpack.c.l.b16 %v202
      %v258 = vunpack.c.l.b16 %v203
      %v259 = vunpack.c.l.b16 %v204
      %v260 = vunpack.c.l.b16 %v205
      %v261 = vunpack.c.l.b16 %v206
      %v262 = vunpack.c.l.b16 %v207
      %v263 = vunpack.c.l.b16 %v208
      %v264 = vunpack.c.l.b16 %v209
      %v265 = vunpack.c.l.b16 %v210
      %v266 = vunpack.c.l.b16 %v211
      %v267 = vpack.c.b16 %v244, %v243
      %v268 = vpack.c.b16 %v246, %v245
      %v269 = vpack.c.b16 %v248, %v247
      %v270 = vpack.c.b16 %v250, %v249
      %v271 = vpack.c.b16 %v252, %v251
      %v272 = vpack.c.b16 %v254, %v253
      %v273 = vpack.c.b16 %v256, %v255
      %v274 = vpack.c.b16 %v258, %v257
      %v275 = vpack.c.b16 %v260, %v259
      %v276 = vpack.c.b16 %v262, %v261
      %v277 = vpack.c.b16 %v264, %v263
      %v278 = vpack.c.b16 %v266, %v265
      %vm291 = vcmask 523264
      %v293 = vsel %vm291, %v217, 0
      %295 = vmatprep.subr.bf16.mxu0 0
      %296 = vmatpush1.bf16.msra.mxu0 %v267
      %297 = vmatprep.subr.bf16.mxu0 0
      %298 = vmatpush1.bf16.msra.mxu0 %v268
      %299 = vmatprep.subr.bf16.mxu0 0
      %300 = vmatpush1.bf16.msra.mxu0 %v269
      %301 = vmatprep.subr.bf16.mxu0 0
      %302 = vmatpush1.bf16.msra.mxu0 %v270
      %303 = vmatprep.subr.bf16.mxu0 0
      %304 = vmatpush1.bf16.msra.mxu0 %v271
      %305 = vmatprep.subr.bf16.mxu0 0
      %306 = vmatpush1.bf16.msra.mxu0 %v272
      %307 = vmatprep.subr.bf16.mxu0 0
      %308 = vmatpush1.bf16.msra.mxu0 %v273
      %309 = vmatprep.subr.bf16.mxu0 0
      %310 = vmatpush1.bf16.msra.mxu0 %v274
      %311 = vmatprep.subr.bf16.mxu0 0
      %312 = vmatpush1.bf16.msra.mxu0 %v275
      %313 = vmatprep.subr.bf16.mxu0 0
      %314 = vmatpush1.bf16.msra.mxu0 %v276
      %315 = vmatprep.subr.bf16.mxu0 0
      %316 = vmatpush1.bf16.msra.mxu0 %v277
      %317 = vmatprep.subr.bf16.mxu0 0
      %318 = vmatpush1.bf16.msra.mxu0 %v278
      %319 = vmatprep.subr.bf16.mxu0 0
      %320 = vmatpush1.bf16.msra.mxu0 0
      %321 = vmatprep.subr.bf16.mxu0 0
      %322 = vmatpush1.bf16.msra.mxu0 0
      %323 = vmatprep.subr.bf16.mxu0 0
      %324 = vmatpush1.bf16.msra.mxu0 0
      %325 = vmatprep.subr.bf16.mxu0 0
      %326 = vmatpush1.bf16.msra.mxu0 0
      %327 = vmatprep.mubr.bf16.mxu0 %v293
      %328 = vmatmul.mubr.bf16.gmra.mrb[0].mxu0 %v216
      %v329 = vpop.f32.mrb[0].mxu0
      %v330 = vadd.f32 %v212, %v329
      %v331 = vpop.f32.mrb[0].mxu0
      %v332 = vpop.f32.mrb[0].mxu0
      %v333 = vpop.f32.mrb[0].mxu0
      %334 = vdwg.mxu0
      %335 = vst [vmem:[%s185] sm:$0xff] %v330
      %p336 = scmp.lt.s32.totalorder %s14, 3
      %s337 = scalar_select %p336, %s14, 3
      %s338 = smul.addr %s337, 8
      %s339 = scalar_lea.vmem %s3, %s338
      // Predicated region
      $region33: #{embeddings_forward.1} parent=31 // pred_check
        %p340 = pneg %p105
      $region34: #{embeddings_forward.1} parent=31 // pred_check_branch
        %342 = sbr.rel (%p340) target = $region36
      $region35: #{embeddings_forward.1} parent=31 // pred_region
        _
      $region36: #{embeddings_forward.1} parent=31 // pred_fallthru
        _
    $region32: #{embeddings_forward.1} parent=5 // pred_fallthru
      _
    %p343 = scmp.le.s32.totalorder 2, %s9
    // Predicated region
    $region37: #{embeddings_forward.1} parent=5 // pred_check
      %p344 = pneg %p343
    $region38: #{embeddings_forward.1} parent=5 // pred_check_branch
      %346 = sbr.rel (%p344) target = $region40
    $region39: #{embeddings_forward.1} parent=5 // pred_region
      %s347 = ssub.s32 %s9, 2
      // Predicated region
      $region41: #{embeddings_forward.1} parent=39 // pred_check
        %p348 = pneg %p111
      $region42: #{embeddings_forward.1} parent=39 // pred_check_branch
        %350 = sbr.rel (%p348) target = $region44
      $region43: #{embeddings_forward.1} parent=39 // pred_region
        %p351 = scmp.lt.s32.totalorder %s15, 3
        %s352 = scalar_select %p351, %s15, 3
        %s353 = smul.addr %s352, 8
        %s354 = scalar_lea.vmem %s3, %s353
      $region44: #{embeddings_forward.1} parent=39 // pred_fallthru
        _
    $region40: #{embeddings_forward.1} parent=5 // pred_fallthru
      _
  $region6: #{embeddings_forward.1} parent=0 // loop_footer
    %s13 = sadd.s32 1, %s9
  $region7: #{embeddings_forward.1} parent=0 // loop_footer_branch
    %8 = sbr.rel target = $region3
  $region8: #{embeddings_forward.1} parent=0 // loop_exit
    _

</llo_original>
